<compile_context>
chip_gen: v6e
topology: v6e:2x2x1
jax: 0.10.0
libtpu: 0.0.40
codegen_flags: <defaults>
</compile_context>

<pallas_src>
from itertools import combinations

import jax
import jax.numpy as jnp
from jax.experimental import pallas as pl
from jax.experimental.pallas import tpu as pltpu


def make_afm_kernel(pairs, num_pairs):
    P = num_pairs

    def afm_kernel(x_ref, w_ref, b_ref, h_ref, o_ref, ip_ref):
        # x_ref: (TB, F, E)  w_ref: (E, A)  b_ref: (1, A)  h_ref: (1, A)
        # o_ref: (TB, E)     ip_ref (scratch VMEM): (TB, P, E) f32
        x = x_ref[...].astype(jnp.float32)          # (TB, F, E)
        TB = x.shape[0]
        E = x.shape[2]

        # Pairwise inner products built in-kernel with static slicing.
        for idx, (i, j) in enumerate(pairs):
            ip_ref[:, idx, :] = x[:, i, :] * x[:, j, :]

        w = w_ref[...].astype(jnp.float32)          # (E, A)
        b = b_ref[...].astype(jnp.float32)          # (1, A)
        h = h_ref[...].astype(jnp.float32)          # (1, A)

        # First projection: one long (TB*P, E) @ (E, A) MXU pass.
        ip = ip_ref[...]                            # (TB, P, E)
        s = jnp.dot(ip.reshape(TB * P, E), w,
                    preferred_element_type=jnp.float32)   # (TB*P, A)
        s = jnp.maximum(s + b, 0.0)                        # bias + relu (VPU)

        # Second projection (A -> 1) on VPU/XLU: lane multiply + lane reduce.
        s3 = s.reshape(TB, P, A := w.shape[1])
        score = jnp.sum(s3 * h[None, :, :], axis=-1)       # (TB, P)

        # Softmax over the pair axis (lane axis).
        m = jnp.max(score, axis=-1, keepdims=True)
        e = jnp.exp(score - m)
        denom = jnp.sum(e, axis=-1, keepdims=True)
        norm = e * pl.reciprocal(denom, approx=True)       # (TB, P), EUP rcp

        # Attention-weighted reduction as a per-row (1,P)@(P,E) contraction.
        ip2 = ip_ref[...]                                  # re-read from scratch
        atten_out = jnp.einsum(
            "bqp,bpe->bqe", norm[:, None, :], ip2,
            preferred_element_type=jnp.float32)[:, 0, :]   # (TB, E)

        o_ref[...] = atten_out.astype(o_ref.dtype)

    return afm_kernel


def afm_layer(x_list, atten_weight, atten_bias, projection_h, projection_p,
              *, batch_tile=None):
    """x_list: list of (B, 1, E) arrays. Returns (B, 1)."""
    F = len(x_list)
    x = jnp.concatenate(x_list, axis=1)                    # (B, F, E)
    B, _, E = x.shape
    A = atten_weight.shape[1]

    pairs = tuple(combinations(range(F), 2))
    P = len(pairs)

    # Batch tile: whole batch for small B; for big B, a multiple-of-8 tile so
    # the (TB,F,E) block + (TB,P,E) scratch sit comfortably in VMEM (sized for
    # v7x's 64 MiB) and the batch grid has multiple "parallel" steps.
    if batch_tile is None:
        batch_tile = B if B <= 256 else 256
    TB = min(batch_tile, B)

    n_blocks = pl.cdiv(B, TB)
    Bp = n_blocks * TB
    if Bp != B:
        x = jnp.pad(x, ((0, Bp - B), (0, 0), (0, 0)))

    b2 = atten_bias.reshape(1, A)
    h2 = projection_h.reshape(1, A)

    atten_out = pl.pallas_call(
        make_afm_kernel(pairs, P),
        out_shape=jax.ShapeDtypeStruct((Bp, E), jnp.float32),
        grid_spec=pltpu.PrefetchScalarGridSpec(
            num_scalar_prefetch=0,
            grid=(n_blocks,),
            in_specs=[
                pl.BlockSpec((TB, F, E), lambda i: (i, 0, 0)),
                pl.BlockSpec((E, A), lambda i: (0, 0)),
                pl.BlockSpec((1, A), lambda i: (0, 0)),
                pl.BlockSpec((1, A), lambda i: (0, 0)),
            ],
            out_specs=pl.BlockSpec((TB, E), lambda i: (i, 0)),
            scratch_shapes=[pltpu.VMEM((TB, P, E), jnp.float32)],
        ),
        compiler_params=pltpu.CompilerParams(
            dimension_semantics=("parallel",)),
    )(x, atten_weight, b2, h2)

    atten_out = atten_out[:B]                              # drop batch padding
    # Final tiny projection kept in the wrapper so the kernel output stays
    # lane-dense (width E) instead of a width-1 masked store.
    return atten_out @ projection_p                        # (B, 1)


def afm_reference(x_list, atten_weight, atten_bias, projection_h, projection_p):
    row, col = [], []
    for i, j in combinations(x_list, 2):
        row.append(i)
        col.append(j)
    p = jnp.concatenate(row, axis=1)
    q = jnp.concatenate(col, axis=1)
    ip = p * q
    s = jnp.maximum(jnp.einsum("bpe,ea->bpa", ip, atten_weight) + atten_bias, 0.0)
    s = jnp.einsum("bpa,ao->bpo", s, projection_h)          # (B, P, 1)
    norm = jax.nn.softmax(s, axis=1)
    atten_out = jnp.sum(norm * ip, axis=1)                  # (B, E)
    return atten_out @ projection_p                         # (B, 1)


if __name__ == "__main__":
    B, F, E, A = 2, 5, 8, 4  # batch, num fields, embed_size, atten_factor

    key = jax.random.PRNGKey(0)
    k_x, k_w, k_b, k_h, k_p = jax.random.split(key, 5)

    atten_weight = jax.random.normal(k_w, (E, A), dtype=jnp.float32) * 0.1
    atten_bias = jax.random.normal(k_b, (A,), dtype=jnp.float32) * 0.1
    projection_h = jax.random.normal(k_h, (A, 1), dtype=jnp.float32) * 0.1
    projection_p = jax.random.normal(k_p, (E, 1), dtype=jnp.float32) * 0.1

    x_full = jax.random.normal(k_x, (B, F, E), dtype=jnp.float32)
    x_list = [x_full[:, i:i + 1, :] for i in range(F)]      # list of (B, 1, E)

    out = afm_layer(x_list, atten_weight, atten_bias, projection_h, projection_p)
    out = jax.block_until_ready(out)

    ref = afm_reference(x_list, atten_weight, atten_bias, projection_h, projection_p)
    assert out.shape == (B, 1)
    # Tolerance loosened slightly for pl.reciprocal(approx=True) in the softmax.
    assert jnp.allclose(out, ref, atol=1e-3, rtol=1e-2), (out, ref)

    print("KERNEL_OK")
</pallas_src>

<mosaic_0001>
module attributes {stable_mosaic.version = 11 : i64} {
  func.func @afm_kernel(%arg0: i32, %arg1: memref<2x5x8xf32, #tpu.memory_space<vmem>>, %arg2: memref<8x4xf32, #tpu.memory_space<vmem>>, %arg3: memref<1x4xf32, #tpu.memory_space<vmem>>, %arg4: memref<1x4xf32, #tpu.memory_space<vmem>>, %arg5: memref<2x8xf32, #tpu.memory_space<vmem>>, %arg6: memref<2x10x8xf32, #tpu.memory_space<vmem>>) attributes {dimension_semantics = [#tpu.dimension_semantics<parallel>], iteration_bounds = array<i64: 1>, scalar_prefetch = 0 : i64, scratch_operands = 1 : i64, tpu.core_type = #tpu.core_type<tc>, window_params = [{transform_indices = @transform_0, window_bounds = array<i64: 2, 5, 8>}, {pipeline_mode = #tpu.pipeline_mode<synchronous>, transform_indices = @transform_1, window_bounds = array<i64: 8, 4>}, {pipeline_mode = #tpu.pipeline_mode<synchronous>, transform_indices = @transform_2, window_bounds = array<i64: 1, 4>}, {pipeline_mode = #tpu.pipeline_mode<synchronous>, transform_indices = @transform_3, window_bounds = array<i64: 1, 4>}, {transform_indices = @transform_4, window_bounds = array<i64: 2, 8>}]} {
    %c0 = arith.constant 0 : index
    %c0_0 = arith.constant 0 : index
    %c0_1 = arith.constant 0 : index
    %0 = vector.load %arg1[%c0, %c0_0, %c0_1] : memref<2x5x8xf32, #tpu.memory_space<vmem>>, vector<2x5x8xf32>
    %1 = vector.extract_strided_slice %0 {offsets = [0, 0, 0], sizes = [2, 1, 8], strides = [1, 1, 1]} : vector<2x5x8xf32> to vector<2x1x8xf32>
    %2 = vector.shape_cast %1 : vector<2x1x8xf32> to vector<2x8xf32>
    %3 = vector.extract_strided_slice %0 {offsets = [0, 1, 0], sizes = [2, 1, 8], strides = [1, 1, 1]} : vector<2x5x8xf32> to vector<2x1x8xf32>
    %4 = vector.shape_cast %3 : vector<2x1x8xf32> to vector<2x8xf32>
    %5 = arith.mulf %2, %4 : vector<2x8xf32>
    %c0_2 = arith.constant 0 : index
    %c0_3 = arith.constant 0 : index
    %c0_4 = arith.constant 0 : index
    %6 = vector.load %arg6[%c0_2, %c0_3, %c0_4] : memref<2x10x8xf32, #tpu.memory_space<vmem>>, vector<2x1x8xf32>
    %7 = vector.shape_cast %6 : vector<2x1x8xf32> to vector<2x8xf32>
    %8 = vector.shape_cast %5 : vector<2x8xf32> to vector<2x1x8xf32>
    tpu.vector_store %arg6[%c0_2, %c0_3, %c0_4], %8 {strides = array<i32>} : memref<2x10x8xf32, #tpu.memory_space<vmem>>, vector<2x1x8xf32>,
    %9 = vector.extract_strided_slice %0 {offsets = [0, 0, 0], sizes = [2, 1, 8], strides = [1, 1, 1]} : vector<2x5x8xf32> to vector<2x1x8xf32>
    %10 = vector.shape_cast %9 : vector<2x1x8xf32> to vector<2x8xf32>
    %11 = vector.extract_strided_slice %0 {offsets = [0, 2, 0], sizes = [2, 1, 8], strides = [1, 1, 1]} : vector<2x5x8xf32> to vector<2x1x8xf32>
    %12 = vector.shape_cast %11 : vector<2x1x8xf32> to vector<2x8xf32>
    %13 = arith.mulf %10, %12 : vector<2x8xf32>
    %c0_5 = arith.constant 0 : index
    %c1 = arith.constant 1 : index
    %c0_6 = arith.constant 0 : index
    %14 = vector.load %arg6[%c0_5, %c1, %c0_6] : memref<2x10x8xf32, #tpu.memory_space<vmem>>, vector<2x1x8xf32>
    %15 = vector.shape_cast %14 : vector<2x1x8xf32> to vector<2x8xf32>
    %16 = vector.shape_cast %13 : vector<2x8xf32> to vector<2x1x8xf32>
    tpu.vector_store %arg6[%c0_5, %c1, %c0_6], %16 {strides = array<i32>} : memref<2x10x8xf32, #tpu.memory_space<vmem>>, vector<2x1x8xf32>,
    %17 = vector.extract_strided_slice %0 {offsets = [0, 0, 0], sizes = [2, 1, 8], strides = [1, 1, 1]} : vector<2x5x8xf32> to vector<2x1x8xf32>
    %18 = vector.shape_cast %17 : vector<2x1x8xf32> to vector<2x8xf32>
    %19 = vector.extract_strided_slice %0 {offsets = [0, 3, 0], sizes = [2, 1, 8], strides = [1, 1, 1]} : vector<2x5x8xf32> to vector<2x1x8xf32>
    %20 = vector.shape_cast %19 : vector<2x1x8xf32> to vector<2x8xf32>
    %21 = arith.mulf %18, %20 : vector<2x8xf32>
    %c0_7 = arith.constant 0 : index
    %c2 = arith.constant 2 : index
    %c0_8 = arith.constant 0 : index
    %22 = vector.load %arg6[%c0_7, %c2, %c0_8] : memref<2x10x8xf32, #tpu.memory_space<vmem>>, vector<2x1x8xf32>
    %23 = vector.shape_cast %22 : vector<2x1x8xf32> to vector<2x8xf32>
    %24 = vector.shape_cast %21 : vector<2x8xf32> to vector<2x1x8xf32>
    tpu.vector_store %arg6[%c0_7, %c2, %c0_8], %24 {strides = array<i32>} : memref<2x10x8xf32, #tpu.memory_space<vmem>>, vector<2x1x8xf32>,
    %25 = vector.extract_strided_slice %0 {offsets = [0, 0, 0], sizes = [2, 1, 8], strides = [1, 1, 1]} : vector<2x5x8xf32> to vector<2x1x8xf32>
    %26 = vector.shape_cast %25 : vector<2x1x8xf32> to vector<2x8xf32>
    %27 = vector.extract_strided_slice %0 {offsets = [0, 4, 0], sizes = [2, 1, 8], strides = [1, 1, 1]} : vector<2x5x8xf32> to vector<2x1x8xf32>
    %28 = vector.shape_cast %27 : vector<2x1x8xf32> to vector<2x8xf32>
    %29 = arith.mulf %26, %28 : vector<2x8xf32>
    %c0_9 = arith.constant 0 : index
    %c3 = arith.constant 3 : index
    %c0_10 = arith.constant 0 : index
    %30 = vector.load %arg6[%c0_9, %c3, %c0_10] : memref<2x10x8xf32, #tpu.memory_space<vmem>>, vector<2x1x8xf32>
    %31 = vector.shape_cast %30 : vector<2x1x8xf32> to vector<2x8xf32>
    %32 = vector.shape_cast %29 : vector<2x8xf32> to vector<2x1x8xf32>
    tpu.vector_store %arg6[%c0_9, %c3, %c0_10], %32 {strides = array<i32>} : memref<2x10x8xf32, #tpu.memory_space<vmem>>, vector<2x1x8xf32>,
    %33 = vector.extract_strided_slice %0 {offsets = [0, 1, 0], sizes = [2, 1, 8], strides = [1, 1, 1]} : vector<2x5x8xf32> to vector<2x1x8xf32>
    %34 = vector.shape_cast %33 : vector<2x1x8xf32> to vector<2x8xf32>
    %35 = vector.extract_strided_slice %0 {offsets = [0, 2, 0], sizes = [2, 1, 8], strides = [1, 1, 1]} : vector<2x5x8xf32> to vector<2x1x8xf32>
    %36 = vector.shape_cast %35 : vector<2x1x8xf32> to vector<2x8xf32>
    %37 = arith.mulf %34, %36 : vector<2x8xf32>
    %c0_11 = arith.constant 0 : index
    %c4 = arith.constant 4 : index
    %c0_12 = arith.constant 0 : index
    %38 = vector.load %arg6[%c0_11, %c4, %c0_12] : memref<2x10x8xf32, #tpu.memory_space<vmem>>, vector<2x1x8xf32>
    %39 = vector.shape_cast %38 : vector<2x1x8xf32> to vector<2x8xf32>
    %40 = vector.shape_cast %37 : vector<2x8xf32> to vector<2x1x8xf32>
    tpu.vector_store %arg6[%c0_11, %c4, %c0_12], %40 {strides = array<i32>} : memref<2x10x8xf32, #tpu.memory_space<vmem>>, vector<2x1x8xf32>,
    %41 = vector.extract_strided_slice %0 {offsets = [0, 1, 0], sizes = [2, 1, 8], strides = [1, 1, 1]} : vector<2x5x8xf32> to vector<2x1x8xf32>
    %42 = vector.shape_cast %41 : vector<2x1x8xf32> to vector<2x8xf32>
    %43 = vector.extract_strided_slice %0 {offsets = [0, 3, 0], sizes = [2, 1, 8], strides = [1, 1, 1]} : vector<2x5x8xf32> to vector<2x1x8xf32>
    %44 = vector.shape_cast %43 : vector<2x1x8xf32> to vector<2x8xf32>
    %45 = arith.mulf %42, %44 : vector<2x8xf32>
    %c0_13 = arith.constant 0 : index
    %c5 = arith.constant 5 : index
    %c0_14 = arith.constant 0 : index
    %46 = vector.load %arg6[%c0_13, %c5, %c0_14] : memref<2x10x8xf32, #tpu.memory_space<vmem>>, vector<2x1x8xf32>
    %47 = vector.shape_cast %46 : vector<2x1x8xf32> to vector<2x8xf32>
    %48 = vector.shape_cast %45 : vector<2x8xf32> to vector<2x1x8xf32>
    tpu.vector_store %arg6[%c0_13, %c5, %c0_14], %48 {strides = array<i32>} : memref<2x10x8xf32, #tpu.memory_space<vmem>>, vector<2x1x8xf32>,
    %49 = vector.extract_strided_slice %0 {offsets = [0, 1, 0], sizes = [2, 1, 8], strides = [1, 1, 1]} : vector<2x5x8xf32> to vector<2x1x8xf32>
    %50 = vector.shape_cast %49 : vector<2x1x8xf32> to vector<2x8xf32>
    %51 = vector.extract_strided_slice %0 {offsets = [0, 4, 0], sizes = [2, 1, 8], strides = [1, 1, 1]} : vector<2x5x8xf32> to vector<2x1x8xf32>
    %52 = vector.shape_cast %51 : vector<2x1x8xf32> to vector<2x8xf32>
    %53 = arith.mulf %50, %52 : vector<2x8xf32>
    %c0_15 = arith.constant 0 : index
    %c6 = arith.constant 6 : index
    %c0_16 = arith.constant 0 : index
    %54 = vector.load %arg6[%c0_15, %c6, %c0_16] : memref<2x10x8xf32, #tpu.memory_space<vmem>>, vector<2x1x8xf32>
    %55 = vector.shape_cast %54 : vector<2x1x8xf32> to vector<2x8xf32>
    %56 = vector.shape_cast %53 : vector<2x8xf32> to vector<2x1x8xf32>
    tpu.vector_store %arg6[%c0_15, %c6, %c0_16], %56 {strides = array<i32>} : memref<2x10x8xf32, #tpu.memory_space<vmem>>, vector<2x1x8xf32>,
    %57 = vector.extract_strided_slice %0 {offsets = [0, 2, 0], sizes = [2, 1, 8], strides = [1, 1, 1]} : vector<2x5x8xf32> to vector<2x1x8xf32>
    %58 = vector.shape_cast %57 : vector<2x1x8xf32> to vector<2x8xf32>
    %59 = vector.extract_strided_slice %0 {offsets = [0, 3, 0], sizes = [2, 1, 8], strides = [1, 1, 1]} : vector<2x5x8xf32> to vector<2x1x8xf32>
    %60 = vector.shape_cast %59 : vector<2x1x8xf32> to vector<2x8xf32>
    %61 = arith.mulf %58, %60 : vector<2x8xf32>
    %c0_17 = arith.constant 0 : index
    %c7 = arith.constant 7 : index
    %c0_18 = arith.constant 0 : index
    %62 = vector.load %arg6[%c0_17, %c7, %c0_18] : memref<2x10x8xf32, #tpu.memory_space<vmem>>, vector<2x1x8xf32>
    %63 = vector.shape_cast %62 : vector<2x1x8xf32> to vector<2x8xf32>
    %64 = vector.shape_cast %61 : vector<2x8xf32> to vector<2x1x8xf32>
    tpu.vector_store %arg6[%c0_17, %c7, %c0_18], %64 {strides = array<i32>} : memref<2x10x8xf32, #tpu.memory_space<vmem>>, vector<2x1x8xf32>,
    %65 = vector.extract_strided_slice %0 {offsets = [0, 2, 0], sizes = [2, 1, 8], strides = [1, 1, 1]} : vector<2x5x8xf32> to vector<2x1x8xf32>
    %66 = vector.shape_cast %65 : vector<2x1x8xf32> to vector<2x8xf32>
    %67 = vector.extract_strided_slice %0 {offsets = [0, 4, 0], sizes = [2, 1, 8], strides = [1, 1, 1]} : vector<2x5x8xf32> to vector<2x1x8xf32>
    %68 = vector.shape_cast %67 : vector<2x1x8xf32> to vector<2x8xf32>
    %69 = arith.mulf %66, %68 : vector<2x8xf32>
    %c0_19 = arith.constant 0 : index
    %c8 = arith.constant 8 : index
    %c0_20 = arith.constant 0 : index
    %70 = vector.load %arg6[%c0_19, %c8, %c0_20] : memref<2x10x8xf32, #tpu.memory_space<vmem>>, vector<2x1x8xf32>
    %71 = vector.shape_cast %70 : vector<2x1x8xf32> to vector<2x8xf32>
    %72 = vector.shape_cast %69 : vector<2x8xf32> to vector<2x1x8xf32>
    tpu.vector_store %arg6[%c0_19, %c8, %c0_20], %72 {strides = array<i32>} : memref<2x10x8xf32, #tpu.memory_space<vmem>>, vector<2x1x8xf32>,
    %73 = vector.extract_strided_slice %0 {offsets = [0, 3, 0], sizes = [2, 1, 8], strides = [1, 1, 1]} : vector<2x5x8xf32> to vector<2x1x8xf32>
    %74 = vector.shape_cast %73 : vector<2x1x8xf32> to vector<2x8xf32>
    %75 = vector.extract_strided_slice %0 {offsets = [0, 4, 0], sizes = [2, 1, 8], strides = [1, 1, 1]} : vector<2x5x8xf32> to vector<2x1x8xf32>
    %76 = vector.shape_cast %75 : vector<2x1x8xf32> to vector<2x8xf32>
    %77 = arith.mulf %74, %76 : vector<2x8xf32>
    %c0_21 = arith.constant 0 : index
    %c9 = arith.constant 9 : index
    %c0_22 = arith.constant 0 : index
    %78 = vector.load %arg6[%c0_21, %c9, %c0_22] : memref<2x10x8xf32, #tpu.memory_space<vmem>>, vector<2x1x8xf32>
    %79 = vector.shape_cast %78 : vector<2x1x8xf32> to vector<2x8xf32>
    %80 = vector.shape_cast %77 : vector<2x8xf32> to vector<2x1x8xf32>
    tpu.vector_store %arg6[%c0_21, %c9, %c0_22], %80 {strides = array<i32>} : memref<2x10x8xf32, #tpu.memory_space<vmem>>, vector<2x1x8xf32>,
    %c0_23 = arith.constant 0 : index
    %c0_24 = arith.constant 0 : index
    %81 = vector.load %arg2[%c0_23, %c0_24] : memref<8x4xf32, #tpu.memory_space<vmem>>, vector<8x4xf32>
    %c0_25 = arith.constant 0 : index
    %c0_26 = arith.constant 0 : index
    %82 = vector.load %arg3[%c0_25, %c0_26] : memref<1x4xf32, #tpu.memory_space<vmem>>, vector<1x4xf32>
    %c0_27 = arith.constant 0 : index
    %c0_28 = arith.constant 0 : index
    %83 = vector.load %arg4[%c0_27, %c0_28] : memref<1x4xf32, #tpu.memory_space<vmem>>, vector<1x4xf32>
    %c0_29 = arith.constant 0 : index
    %c0_30 = arith.constant 0 : index
    %c0_31 = arith.constant 0 : index
    %84 = vector.load %arg6[%c0_29, %c0_30, %c0_31] : memref<2x10x8xf32, #tpu.memory_space<vmem>>, vector<2x10x8xf32>
    %85 = vector.shape_cast %84 : vector<2x10x8xf32> to vector<20x8xf32>
    %cst = arith.constant dense<0.000000e+00> : vector<20x4xf32>
    %86 = tpu.matmul %85, %81, %cst {dimension_numbers = #tpu.dot_dimension_numbers<[1], [0], [0], [1], [0, 0, 1, 1], [], []>} : vector<20x8xf32>, vector<8x4xf32>, vector<20x4xf32> -> vector<20x4xf32>
    %87 = vector.broadcast %82 : vector<1x4xf32> to vector<20x4xf32>
    %88 = arith.addf %86, %87 : vector<20x4xf32>
    %cst_32 = arith.constant 0.000000e+00 : f32
    %89 = vector.broadcast %cst_32 : f32 to vector<20x4xf32>
    %90 = arith.maximumf %88, %89 : vector<20x4xf32>
    %91 = vector.shape_cast %90 : vector<20x4xf32> to vector<2x10x4xf32>
    %92 = vector.shape_cast %83 : vector<1x4xf32> to vector<1x1x4xf32>
    %93 = vector.broadcast %92 : vector<1x1x4xf32> to vector<2x10x4xf32>
    %94 = arith.mulf %91, %93 : vector<2x10x4xf32>
    %cst_33 = arith.constant dense<0.000000e+00> : vector<2x10xf32>
    %95 = vector.multi_reduction <add>, %94, %cst_33 [2] : vector<2x10x4xf32> to vector<2x10xf32>
    %cst_34 = arith.constant dense<0xFF800000> : vector<2xf32>
    %96 = vector.multi_reduction <maximumf>, %95, %cst_34 [1] : vector<2x10xf32> to vector<2xf32>
    %97 = vector.shape_cast %96 : vector<2xf32> to vector<2x1xf32>
    %98 = vector.broadcast %97 : vector<2x1xf32> to vector<2x10xf32>
    %99 = arith.subf %95, %98 : vector<2x10xf32>
    %100 = math.exp %99 : vector<2x10xf32>
    %cst_35 = arith.constant dense<0.000000e+00> : vector<2xf32>
    %101 = vector.multi_reduction <add>, %100, %cst_35 [1] : vector<2x10xf32> to vector<2xf32>
    %102 = vector.shape_cast %101 : vector<2xf32> to vector<2x1xf32>
    %103 = tpu.reciprocal %102 {approx = true} : vector<2x1xf32> -> vector<2x1xf32>
    %104 = vector.broadcast %103 : vector<2x1xf32> to vector<2x10xf32>
    %105 = arith.mulf %100, %104 : vector<2x10xf32>
    %c0_36 = arith.constant 0 : index
    %c0_37 = arith.constant 0 : index
    %c0_38 = arith.constant 0 : index
    %106 = vector.load %arg6[%c0_36, %c0_37, %c0_38] : memref<2x10x8xf32, #tpu.memory_space<vmem>>, vector<2x10x8xf32>
    %107 = vector.shape_cast %105 : vector<2x10xf32> to vector<2x1x10xf32>
    "tpu.trace_start"() <{level = 10 : i32, message = "bqp,bpe->bqe"}> : () -> ()
    %cst_39 = arith.constant dense<0.000000e+00> : vector<2x1x8xf32>
    %108 = tpu.matmul %107, %106, %cst_39 {dimension_numbers = #tpu.dot_dimension_numbers<[2], [1], [1], [2], [0, 0, 0, 1, 1, 2], [0], [0]>} : vector<2x1x10xf32>, vector<2x10x8xf32>, vector<2x1x8xf32> -> vector<2x1x8xf32>
    "tpu.trace_stop"() : () -> ()
    %109 = vector.shape_cast %108 : vector<2x1x8xf32> to vector<2x8xf32>
    %c0_40 = arith.constant 0 : index
    %c0_41 = arith.constant 0 : index
    %110 = vector.load %arg5[%c0_40, %c0_41] : memref<2x8xf32, #tpu.memory_space<vmem>>, vector<2x8xf32>
    tpu.vector_store %arg5[%c0_40, %c0_41], %109 {strides = array<i32>} : memref<2x8xf32, #tpu.memory_space<vmem>>, vector<2x8xf32>,
    return
  }
  func.func @transform_0(%arg0: i32) -> (i32, i32, i32) {
    %c0_i32 = arith.constant 0 : i32
    %c0_i32_0 = arith.constant 0 : i32
    %c0_i32_1 = arith.constant 0 : i32
    return %arg0, %c0_i32, %c0_i32_0 : i32, i32, i32
  }
  func.func @transform_1(%arg0: i32) -> (i32, i32) {
    %c0_i32 = arith.constant 0 : i32
    %c0_i32_0 = arith.constant 0 : i32
    %c0_i32_1 = arith.constant 0 : i32
    return %c0_i32, %c0_i32_0 : i32, i32
  }
  func.func @transform_2(%arg0: i32) -> (i32, i32) {
    %c0_i32 = arith.constant 0 : i32
    %c0_i32_0 = arith.constant 0 : i32
    %c0_i32_1 = arith.constant 0 : i32
    return %c0_i32, %c0_i32_0 : i32, i32
  }
  func.func @transform_3(%arg0: i32) -> (i32, i32) {
    %c0_i32 = arith.constant 0 : i32
    %c0_i32_0 = arith.constant 0 : i32
    %c0_i32_1 = arith.constant 0 : i32
    return %c0_i32, %c0_i32_0 : i32, i32
  }
  func.func @transform_4(%arg0: i32) -> (i32, i32) {
    %c0_i32 = arith.constant 0 : i32
    %c0_i32_0 = arith.constant 0 : i32
    return %arg0, %c0_i32 : i32, i32
  }
}

</mosaic_0001>

<llo_original>
// kernel: tpu_custom_call.1
$region0: #{tpu_custom_call.1}
  #allocation0 [shape = 'u32[]', space=smem, size = 0x4, offset = 0x4, fixed_abs, tag = 'smem constant byte address 0x4 - core index']
  #allocation1 [shape = 'u32[144,128]{1,0:T(1,128)}', space=vmem, size = 0x12000, scoped, tag = 'internal scratch']
  #allocation2 [shape = 'f32[2,10,8]{2,1,0:T(8,128)}', space=vmem, size = 0x4000, scoped, tag = 'scratch operand']
  %s0 = inlined_call_operand.vmem [shape: f32[2,5,8], index: 0, kind: input, shape index: {}]
  %s1 = inlined_call_operand.vmem [shape: f32[8,4], index: 1, kind: input, shape index: {}]
  %s2 = inlined_call_operand.vmem [shape: f32[1,4], index: 2, kind: input, shape index: {}]
  %s3 = inlined_call_operand.vmem [shape: f32[1,4], index: 3, kind: input, shape index: {}]
  %s4 = inlined_call_operand.hbm [shape: f32[2,8], index: 4, kind: output, shape index: {}]
  %s5 = sld [smem:[#allocation0]]
  $region26: #{tpu_custom_call.1} parent=0
    _
  %s7 = ssub.s32 1, %s5
  %s8 = scalar_select 0, %s7, %s5
  $region1: #{tpu_custom_call.1} parent=0
    #allocation3 [shape = 'u8[1024]{0}', space=vmem, size = 0x400, scoped, tag = 'output window, operand 0, single buffered']
    #allocation4 [shape = 's32[1]{0}', space=sflag, size = 0x4, scoped, tag = 'scoped memory for tpu_custom_call.1']
    %9 = vsyncpa [#allocation4], 0
    // Predicated region
    $region2: #{tpu_custom_call.1} parent=1 // pred_check
      _
    $region3: #{tpu_custom_call.1} parent=1 // pred_check_branch
      %11 = sbr.rel (0) target = $region5
    $region4: #{tpu_custom_call.1} parent=1 // pred_region
      _
    $region5: #{tpu_custom_call.1} parent=1 // pred_fallthru
      _
    // Predicated region
    $region6: #{tpu_custom_call.1} parent=1 // pred_check
      _
    $region7: #{tpu_custom_call.1} parent=1 // pred_check_branch
      %13 = sbr.rel (0) target = $region9
    $region8: #{tpu_custom_call.1} parent=1 // pred_region
      _
    $region9: #{tpu_custom_call.1} parent=1 // pred_fallthru
      _
    // Predicated region
    $region10: #{tpu_custom_call.1} parent=1 // pred_check
      _
    $region11: #{tpu_custom_call.1} parent=1 // pred_check_branch
      %15 = sbr.rel (0) target = $region13
    $region12: #{tpu_custom_call.1} parent=1 // pred_region
      _
    $region13: #{tpu_custom_call.1} parent=1 // pred_fallthru
      _
    // Predicated region
    $region14: #{tpu_custom_call.1} parent=1 // pred_check
      _
    $region15: #{tpu_custom_call.1} parent=1 // pred_check_branch
      %17 = sbr.rel (0) target = $region17
    $region16: #{tpu_custom_call.1} parent=1 // pred_region
      _
    $region17: #{tpu_custom_call.1} parent=1 // pred_fallthru
      _
    %v18 = vld [vmem:[%s0] sm:$0x1f]
    %v19 = vld [vmem:[%s0 + $0x8] sm:$0x1f]
    %v22 = vrot.slane %v18, 1
    %v23 = vrot.slane %v19, 1
    %v26 = vmul.f32 %v18, %v22
    %v27 = vmul.f32 %v19, %v23
    %vm28 = vcmask 57344
    %29 = vst.msk [vmem:[#allocation2] sm:$0x1] %vm28, %v26
    %30 = vst.msk [vmem:[#allocation2 + $0x10] sm:$0x1] %vm28, %v27
    %v31 = vrot.slane %v18, 2
    %v32 = vrot.slane %v19, 2
    %v35 = vmul.f32 %v18, %v31
    %v36 = vmul.f32 %v19, %v32
    %37 = vst.msk [vmem:[#allocation2 + $0x1] sm:$0x1] %vm28, %v35
    %38 = vst.msk [vmem:[#allocation2 + $0x11] sm:$0x1] %vm28, %v36
    %v39 = vrot.slane %v18, 3
    %v40 = vrot.slane %v19, 3
    %v43 = vmul.f32 %v18, %v39
    %v44 = vmul.f32 %v19, %v40
    %45 = vst.msk [vmem:[#allocation2 + $0x2] sm:$0x1] %vm28, %v43
    %46 = vst.msk [vmem:[#allocation2 + $0x12] sm:$0x1] %vm28, %v44
    %v47 = vrot.slane %v18, 4
    %v48 = vrot.slane %v19, 4
    %v51 = vmul.f32 %v18, %v47
    %v52 = vmul.f32 %v19, %v48
    %53 = vst.msk [vmem:[#allocation2 + $0x3] sm:$0x1] %vm28, %v51
    %54 = vst.msk [vmem:[#allocation2 + $0x13] sm:$0x1] %vm28, %v52
    %vm55 = vcmask 58369
    %56 = vst.msk [vmem:[#allocation2 + $0x3] sm:$0x2] %vm55, %v26
    %57 = vst.msk [vmem:[#allocation2 + $0x13] sm:$0x2] %vm55, %v27
    %58 = vst.msk [vmem:[#allocation2 + $0x4] sm:$0x2] %vm55, %v35
    %59 = vst.msk [vmem:[#allocation2 + $0x14] sm:$0x2] %vm55, %v36
    %60 = vst.msk [vmem:[#allocation2 + $0x5] sm:$0x2] %vm55, %v43
    %61 = vst.msk [vmem:[#allocation2 + $0x15] sm:$0x2] %vm55, %v44
    %vm62 = vcmask 59394
    %63 = vst.msk [vmem:[#allocation2 + $0x5] sm:$0x4] %vm62, %v26
    %64 = vst.msk [vmem:[#allocation2 + $0x15] sm:$0x4] %vm62, %v27
    %65 = vst.msk [vmem:[#allocation2 + $0x6] sm:$0x4] %vm62, %v35
    %66 = vst.msk [vmem:[#allocation2 + $0x16] sm:$0x4] %vm62, %v36
    %vm67 = vcmask 60419
    %68 = vst.msk [vmem:[#allocation2 + $0x6] sm:$0x8] %vm67, %v26
    %69 = vst.msk [vmem:[#allocation2 + $0x16] sm:$0x8] %vm67, %v27
    %v70 = vld [vmem:[%s1] sm:$0xff]
    %v71 = vld [vmem:[%s2] sm:$0x1]
    %v72 = vld [vmem:[%s3] sm:$0x1]
    %v73 = vld [vmem:[#allocation2] sm:$0xff]
    %v74 = vld [vmem:[#allocation2 + $0x8] sm:$0x3]
    %v75 = vld [vmem:[#allocation2 + $0x10] sm:$0xff]
    %v76 = vld [vmem:[#allocation2 + $0x18] sm:$0x3]
    %v81 = vcombine.high %v73, %v73
    %v83 = vunpack.c.l.s4 1983009808
    %v84 = vunpack.c.0.s8 %v83
    %v85 = vlaneseq
    %v86 = vshrl.u32 %v85, 7
    %v87 = vsub.s32 %v84, %v86
    %v88 = vrot.slane %v73, %v87
    %v90 = vunpack.c.l.s4 1983009808
    %v91 = vunpack.c.0.s8 %v90
    %v92 = vlaneseq
    %v93 = vshrl.u32 %v92, 7
    %v94 = vsub.s32 %v91, %v93
    %v95 = vrot.slane %v81, %v94
    %v96 = vcombine.high %v88, %v88
    %v97 = vcombine.high %v95, %v95
    %v99 = vunpack.c.l.s4 1983009808
    %v100 = vunpack.c.0.s8 %v99
    %v101 = vlaneseq
    %v102 = vshrl.u32 %v101, 7
    %v103 = vsub.s32 %v100, %v102
    %v104 = vrot.slane %v74, %v103
    %v105 = vcombine.high %v75, %v75
    %v107 = vunpack.c.l.s4 1983009808
    %v108 = vunpack.c.0.s8 %v107
    %v109 = vlaneseq
    %v110 = vshrl.u32 %v109, 7
    %v111 = vsub.s32 %v108, %v110
    %v112 = vrot.slane %v75, %v111
    %v114 = vunpack.c.l.s4 1983009808
    %v115 = vunpack.c.0.s8 %v114
    %v116 = vlaneseq
    %v117 = vshrl.u32 %v116, 7
    %v118 = vsub.s32 %v115, %v117
    %v119 = vrot.slane %v105, %v118
    %v120 = vcombine.high %v112, %v112
    %v121 = vcombine.high %v119, %v119
    %v123 = vunpack.c.l.s4 1983009808
    %v124 = vunpack.c.0.s8 %v123
    %v125 = vlaneseq
    %v126 = vshrl.u32 %v125, 7
    %v127 = vsub.s32 %v124, %v126
    %v128 = vrot.slane %v76, %v127
    %v130 = vlaneseq
    %v131 = vshrl.u32 %v130, 7
    %v132 = vsub.s32 0, %v131
    %v133 = vrot.slane %v71, %v132
    %v135 = vcombine.low %v88, %v96
    %v136 = vcombine.low %v95, %v97
    %v138 = vunpack.c.l.s4 1983009808
    %v139 = vunpack.c.0.s8 %v138
    %v140 = vlaneseq
    %v141 = vshrl.u32 %v140, 7
    %v142 = vsub.s32 %v139, %v141
    %v143 = vrot.slane %v135, %v142
    %v145 = vunpack.c.l.s4 1983009808
    %v146 = vunpack.c.0.s8 %v145
    %v147 = vlaneseq
    %v148 = vshrl.u32 %v147, 7
    %v149 = vsub.s32 %v146, %v148
    %v150 = vrot.slane %v136, %v149
    %v151 = vcombine.low %v143, %v150
    %v152 = vcombine.low %v104, %v112
    %v153 = vcombine.low %v120, %v119
    %v155 = vunpack.c.l.s4 1983009808
    %v156 = vunpack.c.0.s8 %v155
    %v157 = vlaneseq
    %v158 = vshrl.u32 %v157, 7
    %v159 = vsub.s32 %v156, %v158
    %v160 = vrot.slane %v152, %v159
    %v162 = vunpack.c.l.s4 1983009808
    %v163 = vunpack.c.0.s8 %v162
    %v164 = vlaneseq
    %v165 = vshrl.u32 %v164, 7
    %v166 = vsub.s32 %v163, %v165
    %v167 = vrot.slane %v153, %v166
    %v168 = vcombine.low %v160, %v167
    %v169 = vcombine.low %v121, %v128
    %v171 = vunpack.c.l.s4 1983009808
    %v172 = vunpack.c.0.s8 %v171
    %v173 = vlaneseq
    %v174 = vshrl.u32 %v173, 7
    %v175 = vsub.s32 %v172, %v174
    %v176 = vrot.slane %v169, %v175
    %vm177 = vcmask 64512
    %v178 = vsel %vm177, %v151, 0
    %v180 = vsel %vm177, %v168, 0
    %v182 = vsel %vm177, %v176, 0
    %184 = vmatprep.subr.mxu0 0.0
    %185 = vmatpush1.msra.mxu0 0.0
    %186 = vmatprep.subr.mxu0 0.0
    %187 = vmatpush1.msra.mxu0 0.0
    %188 = vmatprep.subr.mxu0 0.0
    %189 = vmatpush1.msra.mxu0 0.0
    %190 = vmatprep.subr.mxu0 0.0
    %191 = vmatpush1.msra.mxu0 0.0
    %192 = vmatprep.subr.mxu0 0.0
    %193 = vmatpush1.msra.mxu0 0.0
    %194 = vmatprep.subr.mxu0 0.0
    %195 = vmatpush1.msra.mxu0 0.0
    %196 = vmatprep.subr.mxu0 0.0
    %197 = vmatpush1.msra.mxu0 0.0
    %198 = vmatprep.subr.mxu0 0.0
    %199 = vmatpush1.msra.mxu0 0.0
    %200 = vmatprep.subr.mxu0 0.0
    %201 = vmatpush1.msra.mxu0 0.0
    %202 = vmatprep.subr.mxu0 0.0
    %203 = vmatpush1.msra.mxu0 0.0
    %204 = vmatprep.subr.mxu0 0.0
    %205 = vmatpush1.msra.mxu0 0.0
    %206 = vmatprep.subr.mxu0 0.0
    %207 = vmatpush1.msra.mxu0 0.0
    %208 = vmatprep.subr.mxu0 0.0
    %209 = vmatpush1.msra.mxu0 0.0
    %210 = vmatprep.subr.mxu0 0.0
    %211 = vmatpush1.msra.mxu0 0.0
    %212 = vmatprep.subr.mxu0 0.0
    %213 = vmatpush1.msra.mxu0 0.0
    %214 = vmatprep.subr.mxu0 0.0
    %215 = vmatpush1.msra.mxu0 %v70
    %216 = vmatprep.subr.mxu0 0.0
    %217 = vmatpush2.msra.mxu0 0.0
    %218 = vmatprep.subr.mxu0 0.0
    %219 = vmatpush2.msra.mxu0 0.0
    %220 = vmatprep.subr.mxu0 0.0
    %221 = vmatpush2.msra.mxu0 0.0
    %222 = vmatprep.subr.mxu0 0.0
    %223 = vmatpush2.msra.mxu0 0.0
    %224 = vmatprep.subr.mxu0 0.0
    %225 = vmatpush2.msra.mxu0 0.0
    %226 = vmatprep.subr.mxu0 0.0
    %227 = vmatpush2.msra.mxu0 0.0
    %228 = vmatprep.subr.mxu0 0.0
    %229 = vmatpush2.msra.mxu0 0.0
    %230 = vmatprep.subr.mxu0 0.0
    %231 = vmatpush2.msra.mxu0 0.0
    %232 = vmatprep.subr.mxu0 0.0
    %233 = vmatpush2.msra.mxu0 0.0
    %234 = vmatprep.subr.mxu0 0.0
    %235 = vmatpush2.msra.mxu0 0.0
    %236 = vmatprep.subr.mxu0 0.0
    %237 = vmatpush2.msra.mxu0 0.0
    %238 = vmatprep.subr.mxu0 0.0
    %239 = vmatpush2.msra.mxu0 0.0
    %240 = vmatprep.subr.mxu0 0.0
    %241 = vmatpush2.msra.mxu0 0.0
    %242 = vmatprep.subr.mxu0 0.0
    %243 = vmatpush2.msra.mxu0 0.0
    %244 = vmatprep.subr.mxu0 0.0
    %245 = vmatpush2.msra.mxu0 0.0
    %246 = vmatprep.subr.mxu0 0.0
    %247 = vmatpush2.msra.mxu0 0.0
    %248 = vmatprep.mubr.f32.mxu0 0.0
    %249 = vmatmul.mubr.f32.gmra.mxu0 %v178
    %v250 = vpop.f32.mrf.mxu0
    %v251 = vadd.f32 %v133, %v250
    %v252 = vpop.f32.mrf.mxu0
    %253 = vmatprep.mubr.f32.mxu0 0.0
    %254 = vmatmul.mubr.f32.gmra.mxu0 %v180
    %v255 = vpop.f32.mrf.mxu0
    %v256 = vadd.f32 %v133, %v255
    %v257 = vpop.f32.mrf.mxu0
    %258 = vmatprep.mubr.f32.mxu0 0.0
    %259 = vmatmul.mubr.f32.gmra.mxu0 %v182
    %v260 = vpop.f32.mrf.mxu0
    %v261 = vadd.f32 %v133, %v260
    %v262 = vpop.f32.mrf.mxu0
    %263 = vdwg.mxu0
    %v264 = vmax.f32 %v251, 0.0
    %v265 = vmax.f32 %v256, 0.0
    %v266 = vmax.f32 %v261, 0.0
    %v270 = vcombine.high %v264, %v264
    %v272 = vunpack.c.l.s4 1983009808
    %v273 = vunpack.c.0.s8 %v272
    %v274 = vlaneseq
    %v275 = vshrl.u32 %v274, 7
    %v276 = vsub.s32 %v273, %v275
    %v277 = vrot.slane %v264, %v276
    %v279 = vunpack.c.l.s4 1983009808
    %v280 = vunpack.c.0.s8 %v279
    %v281 = vlaneseq
    %v282 = vshrl.u32 %v281, 7
    %v283 = vsub.s32 %v280, %v282
    %v284 = vrot.slane %v270, %v283
    %v285 = vcombine.high %v277, %v277
    %v286 = vcombine.high %v284, %v284
    %v287 = vcombine.high %v265, %v265
    %v289 = vunpack.c.l.s4 1983009808
    %v290 = vunpack.c.0.s8 %v289
    %v291 = vlaneseq
    %v292 = vshrl.u32 %v291, 7
    %v293 = vsub.s32 %v290, %v292
    %v294 = vrot.slane %v265, %v293
    %v296 = vunpack.c.l.s4 1983009808
    %v297 = vunpack.c.0.s8 %v296
    %v298 = vlaneseq
    %v299 = vshrl.u32 %v298, 7
    %v300 = vsub.s32 %v297, %v299
    %v301 = vrot.slane %v287, %v300
    %v302 = vcombine.high %v294, %v294
    %v303 = vcombine.high %v301, %v301
    %v305 = vunpack.c.l.s4 1983009808
    %v306 = vunpack.c.0.s8 %v305
    %v307 = vlaneseq
    %v308 = vshrl.u32 %v307, 7
    %v309 = vsub.s32 %v306, %v308
    %v310 = vrot.slane %v266, %v309
    %v311 = vcombine.high %v310, %v310
    %v323 = vlaneseq
    %v324 = vshrl.u32 %v323, 7
    %v325 = vsub.s32 0, %v324
    %v326 = vrot.slane %v72, %v325
    %v327 = vcombine.high %v326, %v326
    %v329 = vunpack.c.l.s4 1983009808
    %v330 = vunpack.c.0.s8 %v329
    %v331 = vlaneseq
    %v332 = vshrl.u32 %v331, 7
    %v333 = vsub.s32 %v330, %v332
    %v334 = vrot.slane %v326, %v333
    %v336 = vunpack.c.l.s4 1983009808
    %v337 = vunpack.c.0.s8 %v336
    %v338 = vlaneseq
    %v339 = vshrl.u32 %v338, 7
    %v340 = vsub.s32 %v337, %v339
    %v341 = vrot.slane %v327, %v340
    %v342 = vcombine.high %v334, %v334
    %v343 = vcombine.high %v341, %v341
    %v348 = vmul.f32 %v277, %v334
    %v349 = vmul.f32 %v285, %v342
    %v350 = vmul.f32 %v284, %v341
    %v351 = vmul.f32 %v286, %v343
    %v352 = vmul.f32 %v294, %v334
    %v353 = vmul.f32 %v302, %v334
    %v354 = vmul.f32 %v301, %v342
    %v355 = vmul.f32 %v303, %v341
    %v356 = vmul.f32 %v310, %v343
    %v357 = vmul.f32 %v311, %v334
    %v368 = vcombine.low %v348, %v349
    %v369 = vcombine.low %v350, %v351
    %v371 = vunpack.c.l.s4 1983009808
    %v372 = vunpack.c.0.s8 %v371
    %v373 = vlaneseq
    %v374 = vshrl.u32 %v373, 7
    %v375 = vsub.s32 %v372, %v374
    %v376 = vrot.slane %v368, %v375
    %v378 = vunpack.c.l.s4 1983009808
    %v379 = vunpack.c.0.s8 %v378
    %v380 = vlaneseq
    %v381 = vshrl.u32 %v380, 7
    %v382 = vsub.s32 %v379, %v381
    %v383 = vrot.slane %v369, %v382
    %v384 = vcombine.low %v376, %v383
    %v386 = vunpack.c.l.s4 1983009808
    %v387 = vunpack.c.0.s8 %v386
    %v388 = vlaneseq
    %v389 = vshrl.u32 %v388, 7
    %v390 = vsub.s32 %v387, %v389
    %v391 = vrot.slane %v352, %v390
    %v392 = vcombine.low %v353, %v354
    %v393 = vcombine.low %v355, %v356
    %v395 = vunpack.c.l.s4 1983009808
    %v396 = vunpack.c.0.s8 %v395
    %v397 = vlaneseq
    %v398 = vshrl.u32 %v397, 7
    %v399 = vsub.s32 %v396, %v398
    %v400 = vrot.slane %v392, %v399
    %v402 = vunpack.c.l.s4 1983009808
    %v403 = vunpack.c.0.s8 %v402
    %v404 = vlaneseq
    %v405 = vshrl.u32 %v404, 7
    %v406 = vsub.s32 %v403, %v405
    %v407 = vrot.slane %v393, %v406
    %v408 = vcombine.low %v400, %v407
    %v410 = vunpack.c.l.s4 1983009808
    %v411 = vunpack.c.0.s8 %v410
    %v412 = vlaneseq
    %v413 = vshrl.u32 %v412, 7
    %v414 = vsub.s32 %v411, %v413
    %v415 = vrot.slane %v357, %v414
    %vm420 = vcmask 31744
    %v421 = vsel %vm420, %v384, 0.0
    %422 = vadd.xlane.f32.xlu0 %v421
    %v423 = vpop.xlane.xlu0 %422
    %vm424 = vcmask 25600
    %v425 = vsel %vm424, %v391, 0.0
    %426 = vadd.xlane.f32.xlu0 %v425
    %v427 = vpop.xlane.xlu0 %426
    %v428 = vsel %vm420, %v408, 0.0
    %429 = vadd.xlane.f32.xlu0 %v428
    %v430 = vpop.xlane.xlu0 %429
    %v431 = vsel %vm424, %v415, 0.0
    %432 = vadd.xlane.f32.xlu0 %v431
    %v433 = vpop.xlane.xlu0 %432
    %v438 = vlaneseq
    %v439 = vand.u32 %v438, 127
    %v440 = vlaneseq
    %v441 = vshrl.u32 %v440, 7
    %v442 = vsub.s32 %v439, %v441
    %v443 = vrot.slane %v423, %v442
    %v444 = vadd.s32 %v439, 4294967288
    %v445 = vlaneseq
    %v446 = vshrl.u32 %v445, 7
    %v447 = vsub.s32 %v444, %v446
    %v448 = vrot.slane %v427, %v447
    %vm449 = vcmask 130112
    %v450 = vsel %vm449, %v448, %v443
    %v451 = vlaneseq
    %v452 = vshrl.u32 %v451, 7
    %v453 = vsub.s32 %v439, %v452
    %v454 = vrot.slane %v430, %v453
    %v455 = vlaneseq
    %v456 = vshrl.u32 %v455, 7
    %v457 = vsub.s32 %v444, %v456
    %v458 = vrot.slane %v433, %v457
    %v459 = vsel %vm449, %v458, %v454
    %vm460 = vcmask 1041409
    %v461 = vsel %vm460, %v459, %v450
    %vm463 = vcmask 74752
    %v464 = vsel %vm463, %v461, -inf
    %465 = vmax.xlane.f32.xlu0 %v464
    %v466 = vpop.xlane.xlu0 %465
    %v468 = vlaneseq
    %v469 = vshrl.u32 %v468, 7
    %v470 = vsub.s32 0, %v469
    %v471 = vrot.slane %v466, %v470
    %v472 = vlaneseq
    %v473 = vshrl.u32 %v472, 7
    %v474 = vsub.s32 1, %v473
    %v475 = vrot.slane %v466, %v474
    %v478 = vsub.f32 %v423, %v471
    %v479 = vsub.f32 %v427, %v471
    %v480 = vsub.f32 %v430, %v475
    %v481 = vsub.f32 %v433, %v475
    %v482 = vmul.f32 %v478, 1.442695
    %v483 = vpow.pop %v482
    %v484 = vmul.f32 %v479, 1.442695
    %v485 = vpow.pop %v484
    %v486 = vmul.f32 %v480, 1.442695
    %v487 = vpow.pop %v486
    %v488 = vmul.f32 %v481, 1.442695
    %v489 = vpow.pop %v488
    %494 = vset.pattern.permute.xlu0 0
    %495 = vperm.xlu0 %494, %v483
    %v496 = vpop.permute.xlu0 %495
    %497 = vset.pattern.permute.xlu0 0
    %498 = vperm.xlu0 %497, %v485
    %v499 = vpop.permute.xlu0 %498
    %500 = vset.pattern.permute.xlu0 0
    %501 = vperm.xlu0 %500, %v487
    %v502 = vpop.permute.xlu0 %501
    %503 = vset.pattern.permute.xlu0 0
    %504 = vperm.xlu0 %503, %v489
    %v505 = vpop.permute.xlu0 %504
    %v506 = vlaneseq
    %v507 = vshrl.u32 %v506, 7
    %v508 = vsub.s32 %v439, %v507
    %v509 = vrot.slane %v496, %v508
    %v510 = vlaneseq
    %v511 = vshrl.u32 %v510, 7
    %v512 = vsub.s32 %v444, %v511
    %v513 = vrot.slane %v499, %v512
    %v514 = vsel %vm449, %v513, %v509
    %v515 = vlaneseq
    %v516 = vshrl.u32 %v515, 7
    %v517 = vsub.s32 %v439, %v516
    %v518 = vrot.slane %v502, %v517
    %v519 = vlaneseq
    %v520 = vshrl.u32 %v519, 7
    %v521 = vsub.s32 %v444, %v520
    %v522 = vrot.slane %v505, %v521
    %v523 = vsel %vm449, %v522, %v518
    %v524 = vsel %vm460, %v523, %v514
    %v526 = vsel %vm463, %v524, 0.0
    %527 = vadd.xlane.f32.xlu0 %v526
    %v528 = vpop.xlane.xlu0 %527
    %v529 = vrcp.pop %v528
    %v531 = vlaneseq
    %v532 = vshrl.u32 %v531, 7
    %v533 = vsub.s32 0, %v532
    %v534 = vrot.slane %v529, %v533
    %v535 = vlaneseq
    %v536 = vshrl.u32 %v535, 7
    %v537 = vsub.s32 1, %v536
    %v538 = vrot.slane %v529, %v537
    %v541 = vmul.f32 %v483, %v534
    %v542 = vmul.f32 %v485, %v534
    %v543 = vmul.f32 %v487, %v538
    %v544 = vmul.f32 %v489, %v538
    %547 = vset.pattern.permute.xlu0 0
    %548 = vperm.xlu0 %547, %v541
    %v549 = vpop.permute.xlu0 %548
    %550 = vset.pattern.permute.xlu0 0
    %551 = vperm.xlu0 %550, %v542
    %v552 = vpop.permute.xlu0 %551
    %v553 = vlaneseq
    %v554 = vshrl.u32 %v553, 7
    %v555 = vsub.s32 %v439, %v554
    %v556 = vrot.slane %v549, %v555
    %v557 = vlaneseq
    %v558 = vshrl.u32 %v557, 7
    %v559 = vsub.s32 %v444, %v558
    %v560 = vrot.slane %v552, %v559
    %v561 = vsel %vm449, %v560, %v556
    %vm562 = vcmask 80896
    %v563 = vsel %vm562, %v561, 0
    %vm565 = vcmask 1041408
    %v566 = vsel %vm565, %v74, 0
    %568 = vmatprep.subr.mxu0 0.0
    %569 = vmatpush1.msra.mxu0 0.0
    %570 = vmatprep.subr.mxu0 0.0
    %571 = vmatpush1.msra.mxu0 0.0
    %572 = vmatprep.subr.mxu0 0.0
    %573 = vmatpush1.msra.mxu0 0.0
    %574 = vmatprep.subr.mxu0 0.0
    %575 = vmatpush1.msra.mxu0 0.0
    %576 = vmatprep.subr.mxu0 0.0
    %577 = vmatpush1.msra.mxu0 0.0
    %578 = vmatprep.subr.mxu0 0.0
    %579 = vmatpush1.msra.mxu0 0.0
    %580 = vmatprep.subr.mxu0 0.0
    %581 = vmatpush1.msra.mxu0 0.0
    %582 = vmatprep.subr.mxu0 0.0
    %583 = vmatpush1.msra.mxu0 0.0
    %584 = vmatprep.subr.mxu0 0.0
    %585 = vmatpush1.msra.mxu0 0.0
    %586 = vmatprep.subr.mxu0 0.0
    %587 = vmatpush1.msra.mxu0 0.0
    %588 = vmatprep.subr.mxu0 0.0
    %589 = vmatpush1.msra.mxu0 0.0
    %590 = vmatprep.subr.mxu0 0.0
    %591 = vmatpush1.msra.mxu0 0.0
    %592 = vmatprep.subr.mxu0 0.0
    %593 = vmatpush1.msra.mxu0 0.0
    %594 = vmatprep.subr.mxu0 0.0
    %595 = vmatpush1.msra.mxu0 0.0
    %596 = vmatprep.subr.mxu0 0.0
    %597 = vmatpush1.msra.mxu0 %v566
    %598 = vmatprep.subr.mxu0 0.0
    %599 = vmatpush1.msra.mxu0 %v73
    %600 = vmatprep.subr.mxu0 0.0
    %601 = vmatpush2.msra.mxu0 0.0
    %602 = vmatprep.subr.mxu0 0.0
    %603 = vmatpush2.msra.mxu0 0.0
    %604 = vmatprep.subr.mxu0 0.0
    %605 = vmatpush2.msra.mxu0 0.0
    %606 = vmatprep.subr.mxu0 0.0
    %607 = vmatpush2.msra.mxu0 0.0
    %608 = vmatprep.subr.mxu0 0.0
    %609 = vmatpush2.msra.mxu0 0.0
    %610 = vmatprep.subr.mxu0 0.0
    %611 = vmatpush2.msra.mxu0 0.0
    %612 = vmatprep.subr.mxu0 0.0
    %613 = vmatpush2.msra.mxu0 0.0
    %614 = vmatprep.subr.mxu0 0.0
    %615 = vmatpush2.msra.mxu0 0.0
    %616 = vmatprep.subr.mxu0 0.0
    %617 = vmatpush2.msra.mxu0 0.0
    %618 = vmatprep.subr.mxu0 0.0
    %619 = vmatpush2.msra.mxu0 0.0
    %620 = vmatprep.subr.mxu0 0.0
    %621 = vmatpush2.msra.mxu0 0.0
    %622 = vmatprep.subr.mxu0 0.0
    %623 = vmatpush2.msra.mxu0 0.0
    %624 = vmatprep.subr.mxu0 0.0
    %625 = vmatpush2.msra.mxu0 0.0
    %626 = vmatprep.subr.mxu0 0.0
    %627 = vmatpush2.msra.mxu0 0.0
    %628 = vmatprep.subr.mxu0 0.0
    %629 = vmatpush2.msra.mxu0 0.0
    %630 = vmatprep.subr.mxu0 0.0
    %631 = vmatpush2.msra.mxu0 0.0
    %632 = vmatprep.mubr.f32.mxu0 0.0
    %633 = vmatmul.mubr.f32.gmra.mxu0 %v563
    %v634 = vpop.f32.mrf.mxu0
    %v635 = vadd.f32 0.0, %v634
    %v636 = vpop.f32.mrf.mxu0
    %637 = vdwg.mxu0
    %640 = vset.pattern.permute.xlu0 0
    %641 = vperm.xlu0 %640, %v543
    %v642 = vpop.permute.xlu0 %641
    %643 = vset.pattern.permute.xlu0 0
    %644 = vperm.xlu0 %643, %v544
    %v645 = vpop.permute.xlu0 %644
    %v646 = vlaneseq
    %v647 = vshrl.u32 %v646, 7
    %v648 = vsub.s32 %v439, %v647
    %v649 = vrot.slane %v642, %v648
    %v650 = vlaneseq
    %v651 = vshrl.u32 %v650, 7
    %v652 = vsub.s32 %v444, %v651
    %v653 = vrot.slane %v645, %v652
    %v654 = vsel %vm449, %v653, %v649
    %v655 = vsel %vm562, %v654, 0
    %v657 = vsel %vm565, %v76, 0
    %659 = vmatprep.subr.mxu0 0.0
    %660 = vmatpush1.msra.mxu0 0.0
    %661 = vmatprep.subr.mxu0 0.0
    %662 = vmatpush1.msra.mxu0 0.0
    %663 = vmatprep.subr.mxu0 0.0
    %664 = vmatpush1.msra.mxu0 0.0
    %665 = vmatprep.subr.mxu0 0.0
    %666 = vmatpush1.msra.mxu0 0.0
    %667 = vmatprep.subr.mxu0 0.0
    %668 = vmatpush1.msra.mxu0 0.0
    %669 = vmatprep.subr.mxu0 0.0
    %670 = vmatpush1.msra.mxu0 0.0
    %671 = vmatprep.subr.mxu0 0.0
    %672 = vmatpush1.msra.mxu0 0.0
    %673 = vmatprep.subr.mxu0 0.0
    %674 = vmatpush1.msra.mxu0 0.0
    %675 = vmatprep.subr.mxu0 0.0
    %676 = vmatpush1.msra.mxu0 0.0
    %677 = vmatprep.subr.mxu0 0.0
    %678 = vmatpush1.msra.mxu0 0.0
    %679 = vmatprep.subr.mxu0 0.0
    %680 = vmatpush1.msra.mxu0 0.0
    %681 = vmatprep.subr.mxu0 0.0
    %682 = vmatpush1.msra.mxu0 0.0
    %683 = vmatprep.subr.mxu0 0.0
    %684 = vmatpush1.msra.mxu0 0.0
    %685 = vmatprep.subr.mxu0 0.0
    %686 = vmatpush1.msra.mxu0 0.0
    %687 = vmatprep.subr.mxu0 0.0
    %688 = vmatpush1.msra.mxu0 %v657
    %689 = vmatprep.subr.mxu0 0.0
    %690 = vmatpush1.msra.mxu0 %v75
    %691 = vmatprep.subr.mxu0 0.0
    %692 = vmatpush2.msra.mxu0 0.0
    %693 = vmatprep.subr.mxu0 0.0
    %694 = vmatpush2.msra.mxu0 0.0
    %695 = vmatprep.subr.mxu0 0.0
    %696 = vmatpush2.msra.mxu0 0.0
    %697 = vmatprep.subr.mxu0 0.0
    %698 = vmatpush2.msra.mxu0 0.0
    %699 = vmatprep.subr.mxu0 0.0
    %700 = vmatpush2.msra.mxu0 0.0
    %701 = vmatprep.subr.mxu0 0.0
    %702 = vmatpush2.msra.mxu0 0.0
    %703 = vmatprep.subr.mxu0 0.0
    %704 = vmatpush2.msra.mxu0 0.0
    %705 = vmatprep.subr.mxu0 0.0
    %706 = vmatpush2.msra.mxu0 0.0
    %707 = vmatprep.subr.mxu0 0.0
    %708 = vmatpush2.msra.mxu0 0.0
    %709 = vmatprep.subr.mxu0 0.0
    %710 = vmatpush2.msra.mxu0 0.0
    %711 = vmatprep.subr.mxu0 0.0
    %712 = vmatpush2.msra.mxu0 0.0
    %713 = vmatprep.subr.mxu0 0.0
    %714 = vmatpush2.msra.mxu0 0.0
    %715 = vmatprep.subr.mxu0 0.0
    %716 = vmatpush2.msra.mxu0 0.0
    %717 = vmatprep.subr.mxu0 0.0
    %718 = vmatpush2.msra.mxu0 0.0
    %719 = vmatprep.subr.mxu0 0.0
    %720 = vmatpush2.msra.mxu0 0.0
    %721 = vmatprep.subr.mxu0 0.0
    %722 = vmatpush2.msra.mxu0 0.0
    %723 = vmatprep.mubr.f32.mxu0 0.0
    %724 = vmatmul.mubr.f32.gmra.mxu0 %v655
    %v725 = vpop.f32.mrf.mxu0
    %v726 = vadd.f32 0.0, %v725
    %v727 = vpop.f32.mrf.mxu0
    %728 = vdwg.mxu0
    %v731 = vrot.slane %v726, 7
    %v732 = vsel %vm460, %v731, %v635
    %vm734 = vcmask 58368
    %735 = vst.msk [vmem:[#allocation3] sm:$0x3] %vm734, %v732
    // Predicated region
    $region18: #{tpu_custom_call.1} parent=1 // pred_check
      _
    $region19: #{tpu_custom_call.1} parent=1 // pred_check_branch
      %737 = sbr.rel (0) target = $region21
    $region20: #{tpu_custom_call.1} parent=1 // pred_region
      %s739 = ssub.s32 32, 32
      %740 = vsyncadd [#allocation4], %s739
      %s742 = sshll.u32 [#allocation3], 4
      %s743 = int_to_ptr.vmem [resolvable:$true] %s742
      %745 = dma.vmem_to_hbm [thread:$0]  %s743, 32, %s4, [#allocation4]
    $region21: #{tpu_custom_call.1} parent=1 // pred_fallthru
      _
    // Predicated region
    $region22: #{tpu_custom_call.1} parent=1 // pred_check
      _
    $region23: #{tpu_custom_call.1} parent=1 // pred_check_branch
      %747 = sbr.rel (0) target = $region25
    $region24: #{tpu_custom_call.1} parent=1 // pred_region
      %748 = dma.done [#allocation4], 32
    $region25: #{tpu_custom_call.1} parent=1 // pred_fallthru
      _
    %749 = vsyncpa [#allocation4], 1

</llo_original>
